<compile_context>
chip_gen: v7x
topology: tpu7x:2x2x1
jax: 0.10.0
libtpu: 0.0.40
codegen_flags: <defaults>
</compile_context>

<pallas_src>
import jax
import jax.numpy as jnp
from jax.experimental import pallas as pl
from jax.experimental.pallas import tpu as pltpu


def _downsample_avg2_kernel(x_ref, pf_ref, w_ref, b_ref, o_ref):
    # x_ref : (1, C, th, 2*Wc)   VMEM  - two window rows back-to-back in lanes
    # pf_ref: (2*Wc, Wo)         VMEM  - 0/1 pooling/compaction matrix
    # w_ref : (Cout, C)          SMEM  - conv weight * 0.25 (f32)
    # b_ref : (Cout,)            SMEM  - conv bias (f32)
    # o_ref : (1, Cout, th, Wo)  VMEM
    cin = x_ref.shape[1]
    cout = o_ref.shape[1]
    pf = pf_ref[...]

    # 2x2 window sum for every channel, fused with the (2*Wc) -> Wo
    # compaction: a single MXU matmul per channel sums all four window taps.
    pooled = [
        jnp.dot(x_ref[0, c], pf, preferred_element_type=jnp.float32)
        for c in range(cin)
    ]

    # 1x1 conv over the tiny channel dims on the VPU (scalar-broadcast MACs).
    # TODO(synk): switch to a (th*Wo, C) @ (C, Cout) MXU dot when C, Cout >= 128.
    for co in range(cout):
        acc = pooled[0] * w_ref[co, 0]
        for c in range(1, cin):
            acc = acc + pooled[c] * w_ref[co, c]
        o_ref[0, co] = (acc + b_ref[co]).astype(o_ref.dtype)


def downsample2d_avg2(x_nchw, weight=None, bias=None):
    """Fused AvgPool2d(2, 2) + optional 1x1 Conv2d 'expand' (NCHW in/out).

    x_nchw: (N, C, H, W); weight: (Cout, C, 1, 1) or None (identity expand);
    bias: (Cout,) or None.  Returns (N, Cout, H//2, W//2).
    """
    N, C, H, W = x_nchw.shape
    Ho, Wo = H // 2, W // 2

    if weight is None:                        # dim == dim_out -> nn.Identity()
        Cout = C
        w2 = jnp.eye(C, dtype=jnp.float32)
    else:
        Cout = weight.shape[0]
        w2 = weight.reshape(Cout, C).astype(jnp.float32)
    w2 = w2 * 0.25                            # fold the 2x2 averaging factor
    b = (jnp.zeros((Cout,), jnp.float32) if bias is None
         else bias.astype(jnp.float32))

    # PyTorch AvgPool2d(2, 2) floors the output size: drop odd trailing row/col.
    if (H % 2) or (W % 2):
        x_nchw = x_nchw[:, :, : 2 * Ho, : 2 * Wo]
    Wc = 2 * Wo                               # (cropped) input width
    Kw = 2 * Wc                               # folded lane dim: two window rows

    # Free, contiguous reshape: row ho holds input rows (2*ho, 2*ho + 1).
    xr = x_nchw.reshape(N, C, Ho, Kw)

    # Pooling/compaction matrix: pf[r*Wc + w, w // 2] = 1.
    col = (jnp.arange(Kw) % Wc) // 2
    pf = (col[:, None] == jnp.arange(Wo)[None, :]).astype(x_nchw.dtype)

    # --- tile selection: biggest Ho-row tile that fits the (per-generation)
    # VMEM budget with double-buffered input/output blocks.
    itemsize = x_nchw.dtype.itemsize
    try:
        vmem_cap = int(pltpu.get_tpu_info().vmem_capacity_bytes)
    except Exception:
        vmem_cap = 64 * 1024 * 1024           # conservative (v7x-sized) fallback
    budget = vmem_cap // 4                    # headroom for pipelining/scratch
    per_row = 2 * (C * Kw * itemsize) + 2 * (Cout * Wo * itemsize)
    th = max(1, min(budget // max(per_row, 1), 2048))
    if th >= Ho:
        th = Ho                               # full dim -> no tiling constraint
    else:
        th = max(8, (th // 8) * 8)            # keep sublane dim tile-aligned

    need = per_row * th + 2 * Kw * Wo * itemsize + (2 << 20)
    vmem_limit = int(min(max(need, 16 << 20), int(vmem_cap * 0.9)))

    grid = (N, pl.cdiv(Ho, th))               # partial last tile is masked

    out = pl.pallas_call(
        _downsample_avg2_kernel,
        out_shape=jax.ShapeDtypeStruct((N, Cout, Ho, Wo), x_nchw.dtype),
        grid=grid,
        in_specs=[
            pl.BlockSpec((1, C, th, Kw), lambda n, h: (n, 0, h, 0)),
            pl.BlockSpec((Kw, Wo), lambda n, h: (0, 0)),
            pl.BlockSpec(memory_space=pltpu.MemorySpace.SMEM),
            pl.BlockSpec(memory_space=pltpu.MemorySpace.SMEM),
        ],
        out_specs=pl.BlockSpec((1, Cout, th, Wo), lambda n, h: (n, 0, h, 0)),
        compiler_params=pltpu.CompilerParams(
            dimension_semantics=("parallel", "parallel"),
            vmem_limit_bytes=vmem_limit,
        ),
    )(xr, pf, w2, b)
    return out


def _reference(x_nchw, weight, bias):
    """Pure-JAX reference of Downsample2d(pool_type='avg2') forward (NCHW)."""
    N, C, H, W = x_nchw.shape
    Cout = weight.shape[0]
    xr = x_nchw[:, :, : (H // 2) * 2, : (W // 2) * 2].reshape(
        N, C, H // 2, 2, W // 2, 2)
    pooled = xr.mean(axis=(3, 5))             # AvgPool2d(kernel=2, stride=2)
    out = jnp.einsum("nchw,oc->nohw", pooled, weight.reshape(Cout, C))
    return out + bias[None, :, None, None]


if __name__ == "__main__":
    key = jax.random.PRNGKey(0)
    k1, k2, k3 = jax.random.split(key, 3)

    # Module config: Downsample2d(dim=4, dim_out=8, pool_type='avg2', bias=True)
    N, C, H, W = 2, 4, 16, 16
    Cout = 8

    x = jax.random.normal(k1, (N, C, H, W), dtype=jnp.float32)
    weight = jax.random.normal(k2, (Cout, C, 1, 1), dtype=jnp.float32) * 0.1
    bias = jax.random.normal(k3, (Cout,), dtype=jnp.float32) * 0.1

    out = jax.jit(downsample2d_avg2)(x, weight, bias)
    out = jax.block_until_ready(out)

    ref = _reference(x, weight, bias)
    assert out.shape == (N, Cout, H // 2, W // 2), out.shape
    assert jnp.allclose(out, ref, atol=1e-5, rtol=1e-5), "mismatch vs reference"
    print("KERNEL_OK")
</pallas_src>

<mosaic_0001>
module attributes {stable_mosaic.version = 11 : i64} {
  func.func @_downsample_avg2_kernel(%arg0: i32, %arg1: i32, %arg2: memref<1x4x8x32xf32, #tpu.memory_space<vmem>>, %arg3: memref<32x8xf32, #tpu.memory_space<vmem>>, %arg4: memref<8x4xf32, #tpu.memory_space<smem>>, %arg5: memref<8xf32, #tpu.memory_space<smem>>, %arg6: memref<1x8x8x8xf32, #tpu.memory_space<vmem>>) attributes {dimension_semantics = [#tpu.dimension_semantics<parallel>, #tpu.dimension_semantics<parallel>], iteration_bounds = array<i64: 2, 1>, scalar_prefetch = 0 : i64, scratch_operands = 0 : i64, tpu.core_type = #tpu.core_type<tc>, window_params = [{transform_indices = @transform_0, window_bounds = array<i64: 1, 4, 8, 32>}, {pipeline_mode = #tpu.pipeline_mode<synchronous>, transform_indices = @transform_1, window_bounds = array<i64: 32, 8>}, {transform_indices = @transform_2, window_bounds = array<i64: 8, 4>}, {transform_indices = @transform_3, window_bounds = array<i64: 8>}, {transform_indices = @transform_4, window_bounds = array<i64: 1, 8, 8, 8>}]} {
    %c0 = arith.constant 0 : index
    %c0_0 = arith.constant 0 : index
    %0 = vector.load %arg3[%c0, %c0_0] : memref<32x8xf32, #tpu.memory_space<vmem>>, vector<32x8xf32>
    %c0_1 = arith.constant 0 : index
    %c0_2 = arith.constant 0 : index
    %c0_3 = arith.constant 0 : index
    %c0_4 = arith.constant 0 : index
    %1 = vector.load %arg2[%c0_1, %c0_2, %c0_3, %c0_4] : memref<1x4x8x32xf32, #tpu.memory_space<vmem>>, vector<1x1x8x32xf32>
    %2 = vector.shape_cast %1 : vector<1x1x8x32xf32> to vector<8x32xf32>
    %cst = arith.constant dense<0.000000e+00> : vector<8x8xf32>
    %3 = tpu.matmul %2, %0, %cst {dimension_numbers = #tpu.dot_dimension_numbers<[1], [0], [0], [1], [0, 0, 1, 1], [], []>} : vector<8x32xf32>, vector<32x8xf32>, vector<8x8xf32> -> vector<8x8xf32>
    %c0_5 = arith.constant 0 : index
    %c1 = arith.constant 1 : index
    %c0_6 = arith.constant 0 : index
    %c0_7 = arith.constant 0 : index
    %4 = vector.load %arg2[%c0_5, %c1, %c0_6, %c0_7] : memref<1x4x8x32xf32, #tpu.memory_space<vmem>>, vector<1x1x8x32xf32>
    %5 = vector.shape_cast %4 : vector<1x1x8x32xf32> to vector<8x32xf32>
    %cst_8 = arith.constant dense<0.000000e+00> : vector<8x8xf32>
    %6 = tpu.matmul %5, %0, %cst_8 {dimension_numbers = #tpu.dot_dimension_numbers<[1], [0], [0], [1], [0, 0, 1, 1], [], []>} : vector<8x32xf32>, vector<32x8xf32>, vector<8x8xf32> -> vector<8x8xf32>
    %c0_9 = arith.constant 0 : index
    %c2 = arith.constant 2 : index
    %c0_10 = arith.constant 0 : index
    %c0_11 = arith.constant 0 : index
    %7 = vector.load %arg2[%c0_9, %c2, %c0_10, %c0_11] : memref<1x4x8x32xf32, #tpu.memory_space<vmem>>, vector<1x1x8x32xf32>
    %8 = vector.shape_cast %7 : vector<1x1x8x32xf32> to vector<8x32xf32>
    %cst_12 = arith.constant dense<0.000000e+00> : vector<8x8xf32>
    %9 = tpu.matmul %8, %0, %cst_12 {dimension_numbers = #tpu.dot_dimension_numbers<[1], [0], [0], [1], [0, 0, 1, 1], [], []>} : vector<8x32xf32>, vector<32x8xf32>, vector<8x8xf32> -> vector<8x8xf32>
    %c0_13 = arith.constant 0 : index
    %c3 = arith.constant 3 : index
    %c0_14 = arith.constant 0 : index
    %c0_15 = arith.constant 0 : index
    %10 = vector.load %arg2[%c0_13, %c3, %c0_14, %c0_15] : memref<1x4x8x32xf32, #tpu.memory_space<vmem>>, vector<1x1x8x32xf32>
    %11 = vector.shape_cast %10 : vector<1x1x8x32xf32> to vector<8x32xf32>
    %cst_16 = arith.constant dense<0.000000e+00> : vector<8x8xf32>
    %12 = tpu.matmul %11, %0, %cst_16 {dimension_numbers = #tpu.dot_dimension_numbers<[1], [0], [0], [1], [0, 0, 1, 1], [], []>} : vector<8x32xf32>, vector<32x8xf32>, vector<8x8xf32> -> vector<8x8xf32>
    %c0_17 = arith.constant 0 : index
    %c0_18 = arith.constant 0 : index
    %13 = memref.load %arg4[%c0_17, %c0_18] : memref<8x4xf32, #tpu.memory_space<smem>>
    %14 = vector.broadcast %13 : f32 to vector<8x8xf32>
    %15 = arith.mulf %3, %14 : vector<8x8xf32>
    %c0_19 = arith.constant 0 : index
    %c1_20 = arith.constant 1 : index
    %16 = memref.load %arg4[%c0_19, %c1_20] : memref<8x4xf32, #tpu.memory_space<smem>>
    %17 = vector.broadcast %16 : f32 to vector<8x8xf32>
    %18 = arith.mulf %6, %17 : vector<8x8xf32>
    %19 = arith.addf %15, %18 : vector<8x8xf32>
    %c0_21 = arith.constant 0 : index
    %c2_22 = arith.constant 2 : index
    %20 = memref.load %arg4[%c0_21, %c2_22] : memref<8x4xf32, #tpu.memory_space<smem>>
    %21 = vector.broadcast %20 : f32 to vector<8x8xf32>
    %22 = arith.mulf %9, %21 : vector<8x8xf32>
    %23 = arith.addf %19, %22 : vector<8x8xf32>
    %c0_23 = arith.constant 0 : index
    %c3_24 = arith.constant 3 : index
    %24 = memref.load %arg4[%c0_23, %c3_24] : memref<8x4xf32, #tpu.memory_space<smem>>
    %25 = vector.broadcast %24 : f32 to vector<8x8xf32>
    %26 = arith.mulf %12, %25 : vector<8x8xf32>
    %27 = arith.addf %23, %26 : vector<8x8xf32>
    %c0_25 = arith.constant 0 : index
    %28 = memref.load %arg5[%c0_25] : memref<8xf32, #tpu.memory_space<smem>>
    %29 = vector.broadcast %28 : f32 to vector<8x8xf32>
    %30 = arith.addf %27, %29 : vector<8x8xf32>
    %c0_26 = arith.constant 0 : index
    %c0_27 = arith.constant 0 : index
    %c0_28 = arith.constant 0 : index
    %c0_29 = arith.constant 0 : index
    %31 = vector.load %arg6[%c0_26, %c0_27, %c0_28, %c0_29] : memref<1x8x8x8xf32, #tpu.memory_space<vmem>>, vector<1x1x8x8xf32>
    %32 = vector.shape_cast %31 : vector<1x1x8x8xf32> to vector<8x8xf32>
    %33 = vector.shape_cast %30 : vector<8x8xf32> to vector<1x1x8x8xf32>
    tpu.vector_store %arg6[%c0_26, %c0_27, %c0_28, %c0_29], %33 {strides = array<i32>} : memref<1x8x8x8xf32, #tpu.memory_space<vmem>>, vector<1x1x8x8xf32>,
    %c1_30 = arith.constant 1 : index
    %c0_31 = arith.constant 0 : index
    %34 = memref.load %arg4[%c1_30, %c0_31] : memref<8x4xf32, #tpu.memory_space<smem>>
    %35 = vector.broadcast %34 : f32 to vector<8x8xf32>
    %36 = arith.mulf %3, %35 : vector<8x8xf32>
    %c1_32 = arith.constant 1 : index
    %c1_33 = arith.constant 1 : index
    %37 = memref.load %arg4[%c1_32, %c1_33] : memref<8x4xf32, #tpu.memory_space<smem>>
    %38 = vector.broadcast %37 : f32 to vector<8x8xf32>
    %39 = arith.mulf %6, %38 : vector<8x8xf32>
    %40 = arith.addf %36, %39 : vector<8x8xf32>
    %c1_34 = arith.constant 1 : index
    %c2_35 = arith.constant 2 : index
    %41 = memref.load %arg4[%c1_34, %c2_35] : memref<8x4xf32, #tpu.memory_space<smem>>
    %42 = vector.broadcast %41 : f32 to vector<8x8xf32>
    %43 = arith.mulf %9, %42 : vector<8x8xf32>
    %44 = arith.addf %40, %43 : vector<8x8xf32>
    %c1_36 = arith.constant 1 : index
    %c3_37 = arith.constant 3 : index
    %45 = memref.load %arg4[%c1_36, %c3_37] : memref<8x4xf32, #tpu.memory_space<smem>>
    %46 = vector.broadcast %45 : f32 to vector<8x8xf32>
    %47 = arith.mulf %12, %46 : vector<8x8xf32>
    %48 = arith.addf %44, %47 : vector<8x8xf32>
    %c1_38 = arith.constant 1 : index
    %49 = memref.load %arg5[%c1_38] : memref<8xf32, #tpu.memory_space<smem>>
    %50 = vector.broadcast %49 : f32 to vector<8x8xf32>
    %51 = arith.addf %48, %50 : vector<8x8xf32>
    %c0_39 = arith.constant 0 : index
    %c1_40 = arith.constant 1 : index
    %c0_41 = arith.constant 0 : index
    %c0_42 = arith.constant 0 : index
    %52 = vector.load %arg6[%c0_39, %c1_40, %c0_41, %c0_42] : memref<1x8x8x8xf32, #tpu.memory_space<vmem>>, vector<1x1x8x8xf32>
    %53 = vector.shape_cast %52 : vector<1x1x8x8xf32> to vector<8x8xf32>
    %54 = vector.shape_cast %51 : vector<8x8xf32> to vector<1x1x8x8xf32>
    tpu.vector_store %arg6[%c0_39, %c1_40, %c0_41, %c0_42], %54 {strides = array<i32>} : memref<1x8x8x8xf32, #tpu.memory_space<vmem>>, vector<1x1x8x8xf32>,
    %c2_43 = arith.constant 2 : index
    %c0_44 = arith.constant 0 : index
    %55 = memref.load %arg4[%c2_43, %c0_44] : memref<8x4xf32, #tpu.memory_space<smem>>
    %56 = vector.broadcast %55 : f32 to vector<8x8xf32>
    %57 = arith.mulf %3, %56 : vector<8x8xf32>
    %c2_45 = arith.constant 2 : index
    %c1_46 = arith.constant 1 : index
    %58 = memref.load %arg4[%c2_45, %c1_46] : memref<8x4xf32, #tpu.memory_space<smem>>
    %59 = vector.broadcast %58 : f32 to vector<8x8xf32>
    %60 = arith.mulf %6, %59 : vector<8x8xf32>
    %61 = arith.addf %57, %60 : vector<8x8xf32>
    %c2_47 = arith.constant 2 : index
    %c2_48 = arith.constant 2 : index
    %62 = memref.load %arg4[%c2_47, %c2_48] : memref<8x4xf32, #tpu.memory_space<smem>>
    %63 = vector.broadcast %62 : f32 to vector<8x8xf32>
    %64 = arith.mulf %9, %63 : vector<8x8xf32>
    %65 = arith.addf %61, %64 : vector<8x8xf32>
    %c2_49 = arith.constant 2 : index
    %c3_50 = arith.constant 3 : index
    %66 = memref.load %arg4[%c2_49, %c3_50] : memref<8x4xf32, #tpu.memory_space<smem>>
    %67 = vector.broadcast %66 : f32 to vector<8x8xf32>
    %68 = arith.mulf %12, %67 : vector<8x8xf32>
    %69 = arith.addf %65, %68 : vector<8x8xf32>
    %c2_51 = arith.constant 2 : index
    %70 = memref.load %arg5[%c2_51] : memref<8xf32, #tpu.memory_space<smem>>
    %71 = vector.broadcast %70 : f32 to vector<8x8xf32>
    %72 = arith.addf %69, %71 : vector<8x8xf32>
    %c0_52 = arith.constant 0 : index
    %c2_53 = arith.constant 2 : index
    %c0_54 = arith.constant 0 : index
    %c0_55 = arith.constant 0 : index
    %73 = vector.load %arg6[%c0_52, %c2_53, %c0_54, %c0_55] : memref<1x8x8x8xf32, #tpu.memory_space<vmem>>, vector<1x1x8x8xf32>
    %74 = vector.shape_cast %73 : vector<1x1x8x8xf32> to vector<8x8xf32>
    %75 = vector.shape_cast %72 : vector<8x8xf32> to vector<1x1x8x8xf32>
    tpu.vector_store %arg6[%c0_52, %c2_53, %c0_54, %c0_55], %75 {strides = array<i32>} : memref<1x8x8x8xf32, #tpu.memory_space<vmem>>, vector<1x1x8x8xf32>,
    %c3_56 = arith.constant 3 : index
    %c0_57 = arith.constant 0 : index
    %76 = memref.load %arg4[%c3_56, %c0_57] : memref<8x4xf32, #tpu.memory_space<smem>>
    %77 = vector.broadcast %76 : f32 to vector<8x8xf32>
    %78 = arith.mulf %3, %77 : vector<8x8xf32>
    %c3_58 = arith.constant 3 : index
    %c1_59 = arith.constant 1 : index
    %79 = memref.load %arg4[%c3_58, %c1_59] : memref<8x4xf32, #tpu.memory_space<smem>>
    %80 = vector.broadcast %79 : f32 to vector<8x8xf32>
    %81 = arith.mulf %6, %80 : vector<8x8xf32>
    %82 = arith.addf %78, %81 : vector<8x8xf32>
    %c3_60 = arith.constant 3 : index
    %c2_61 = arith.constant 2 : index
    %83 = memref.load %arg4[%c3_60, %c2_61] : memref<8x4xf32, #tpu.memory_space<smem>>
    %84 = vector.broadcast %83 : f32 to vector<8x8xf32>
    %85 = arith.mulf %9, %84 : vector<8x8xf32>
    %86 = arith.addf %82, %85 : vector<8x8xf32>
    %c3_62 = arith.constant 3 : index
    %c3_63 = arith.constant 3 : index
    %87 = memref.load %arg4[%c3_62, %c3_63] : memref<8x4xf32, #tpu.memory_space<smem>>
    %88 = vector.broadcast %87 : f32 to vector<8x8xf32>
    %89 = arith.mulf %12, %88 : vector<8x8xf32>
    %90 = arith.addf %86, %89 : vector<8x8xf32>
    %c3_64 = arith.constant 3 : index
    %91 = memref.load %arg5[%c3_64] : memref<8xf32, #tpu.memory_space<smem>>
    %92 = vector.broadcast %91 : f32 to vector<8x8xf32>
    %93 = arith.addf %90, %92 : vector<8x8xf32>
    %c0_65 = arith.constant 0 : index
    %c3_66 = arith.constant 3 : index
    %c0_67 = arith.constant 0 : index
    %c0_68 = arith.constant 0 : index
    %94 = vector.load %arg6[%c0_65, %c3_66, %c0_67, %c0_68] : memref<1x8x8x8xf32, #tpu.memory_space<vmem>>, vector<1x1x8x8xf32>
    %95 = vector.shape_cast %94 : vector<1x1x8x8xf32> to vector<8x8xf32>
    %96 = vector.shape_cast %93 : vector<8x8xf32> to vector<1x1x8x8xf32>
    tpu.vector_store %arg6[%c0_65, %c3_66, %c0_67, %c0_68], %96 {strides = array<i32>} : memref<1x8x8x8xf32, #tpu.memory_space<vmem>>, vector<1x1x8x8xf32>,
    %c4 = arith.constant 4 : index
    %c0_69 = arith.constant 0 : index
    %97 = memref.load %arg4[%c4, %c0_69] : memref<8x4xf32, #tpu.memory_space<smem>>
    %98 = vector.broadcast %97 : f32 to vector<8x8xf32>
    %99 = arith.mulf %3, %98 : vector<8x8xf32>
    %c4_70 = arith.constant 4 : index
    %c1_71 = arith.constant 1 : index
    %100 = memref.load %arg4[%c4_70, %c1_71] : memref<8x4xf32, #tpu.memory_space<smem>>
    %101 = vector.broadcast %100 : f32 to vector<8x8xf32>
    %102 = arith.mulf %6, %101 : vector<8x8xf32>
    %103 = arith.addf %99, %102 : vector<8x8xf32>
    %c4_72 = arith.constant 4 : index
    %c2_73 = arith.constant 2 : index
    %104 = memref.load %arg4[%c4_72, %c2_73] : memref<8x4xf32, #tpu.memory_space<smem>>
    %105 = vector.broadcast %104 : f32 to vector<8x8xf32>
    %106 = arith.mulf %9, %105 : vector<8x8xf32>
    %107 = arith.addf %103, %106 : vector<8x8xf32>
    %c4_74 = arith.constant 4 : index
    %c3_75 = arith.constant 3 : index
    %108 = memref.load %arg4[%c4_74, %c3_75] : memref<8x4xf32, #tpu.memory_space<smem>>
    %109 = vector.broadcast %108 : f32 to vector<8x8xf32>
    %110 = arith.mulf %12, %109 : vector<8x8xf32>
    %111 = arith.addf %107, %110 : vector<8x8xf32>
    %c4_76 = arith.constant 4 : index
    %112 = memref.load %arg5[%c4_76] : memref<8xf32, #tpu.memory_space<smem>>
    %113 = vector.broadcast %112 : f32 to vector<8x8xf32>
    %114 = arith.addf %111, %113 : vector<8x8xf32>
    %c0_77 = arith.constant 0 : index
    %c4_78 = arith.constant 4 : index
    %c0_79 = arith.constant 0 : index
    %c0_80 = arith.constant 0 : index
    %115 = vector.load %arg6[%c0_77, %c4_78, %c0_79, %c0_80] : memref<1x8x8x8xf32, #tpu.memory_space<vmem>>, vector<1x1x8x8xf32>
    %116 = vector.shape_cast %115 : vector<1x1x8x8xf32> to vector<8x8xf32>
    %117 = vector.shape_cast %114 : vector<8x8xf32> to vector<1x1x8x8xf32>
    tpu.vector_store %arg6[%c0_77, %c4_78, %c0_79, %c0_80], %117 {strides = array<i32>} : memref<1x8x8x8xf32, #tpu.memory_space<vmem>>, vector<1x1x8x8xf32>,
    %c5 = arith.constant 5 : index
    %c0_81 = arith.constant 0 : index
    %118 = memref.load %arg4[%c5, %c0_81] : memref<8x4xf32, #tpu.memory_space<smem>>
    %119 = vector.broadcast %118 : f32 to vector<8x8xf32>
    %120 = arith.mulf %3, %119 : vector<8x8xf32>
    %c5_82 = arith.constant 5 : index
    %c1_83 = arith.constant 1 : index
    %121 = memref.load %arg4[%c5_82, %c1_83] : memref<8x4xf32, #tpu.memory_space<smem>>
    %122 = vector.broadcast %121 : f32 to vector<8x8xf32>
    %123 = arith.mulf %6, %122 : vector<8x8xf32>
    %124 = arith.addf %120, %123 : vector<8x8xf32>
    %c5_84 = arith.constant 5 : index
    %c2_85 = arith.constant 2 : index
    %125 = memref.load %arg4[%c5_84, %c2_85] : memref<8x4xf32, #tpu.memory_space<smem>>
    %126 = vector.broadcast %125 : f32 to vector<8x8xf32>
    %127 = arith.mulf %9, %126 : vector<8x8xf32>
    %128 = arith.addf %124, %127 : vector<8x8xf32>
    %c5_86 = arith.constant 5 : index
    %c3_87 = arith.constant 3 : index
    %129 = memref.load %arg4[%c5_86, %c3_87] : memref<8x4xf32, #tpu.memory_space<smem>>
    %130 = vector.broadcast %129 : f32 to vector<8x8xf32>
    %131 = arith.mulf %12, %130 : vector<8x8xf32>
    %132 = arith.addf %128, %131 : vector<8x8xf32>
    %c5_88 = arith.constant 5 : index
    %133 = memref.load %arg5[%c5_88] : memref<8xf32, #tpu.memory_space<smem>>
    %134 = vector.broadcast %133 : f32 to vector<8x8xf32>
    %135 = arith.addf %132, %134 : vector<8x8xf32>
    %c0_89 = arith.constant 0 : index
    %c5_90 = arith.constant 5 : index
    %c0_91 = arith.constant 0 : index
    %c0_92 = arith.constant 0 : index
    %136 = vector.load %arg6[%c0_89, %c5_90, %c0_91, %c0_92] : memref<1x8x8x8xf32, #tpu.memory_space<vmem>>, vector<1x1x8x8xf32>
    %137 = vector.shape_cast %136 : vector<1x1x8x8xf32> to vector<8x8xf32>
    %138 = vector.shape_cast %135 : vector<8x8xf32> to vector<1x1x8x8xf32>
    tpu.vector_store %arg6[%c0_89, %c5_90, %c0_91, %c0_92], %138 {strides = array<i32>} : memref<1x8x8x8xf32, #tpu.memory_space<vmem>>, vector<1x1x8x8xf32>,
    %c6 = arith.constant 6 : index
    %c0_93 = arith.constant 0 : index
    %139 = memref.load %arg4[%c6, %c0_93] : memref<8x4xf32, #tpu.memory_space<smem>>
    %140 = vector.broadcast %139 : f32 to vector<8x8xf32>
    %141 = arith.mulf %3, %140 : vector<8x8xf32>
    %c6_94 = arith.constant 6 : index
    %c1_95 = arith.constant 1 : index
    %142 = memref.load %arg4[%c6_94, %c1_95] : memref<8x4xf32, #tpu.memory_space<smem>>
    %143 = vector.broadcast %142 : f32 to vector<8x8xf32>
    %144 = arith.mulf %6, %143 : vector<8x8xf32>
    %145 = arith.addf %141, %144 : vector<8x8xf32>
    %c6_96 = arith.constant 6 : index
    %c2_97 = arith.constant 2 : index
    %146 = memref.load %arg4[%c6_96, %c2_97] : memref<8x4xf32, #tpu.memory_space<smem>>
    %147 = vector.broadcast %146 : f32 to vector<8x8xf32>
    %148 = arith.mulf %9, %147 : vector<8x8xf32>
    %149 = arith.addf %145, %148 : vector<8x8xf32>
    %c6_98 = arith.constant 6 : index
    %c3_99 = arith.constant 3 : index
    %150 = memref.load %arg4[%c6_98, %c3_99] : memref<8x4xf32, #tpu.memory_space<smem>>
    %151 = vector.broadcast %150 : f32 to vector<8x8xf32>
    %152 = arith.mulf %12, %151 : vector<8x8xf32>
    %153 = arith.addf %149, %152 : vector<8x8xf32>
    %c6_100 = arith.constant 6 : index
    %154 = memref.load %arg5[%c6_100] : memref<8xf32, #tpu.memory_space<smem>>
    %155 = vector.broadcast %154 : f32 to vector<8x8xf32>
    %156 = arith.addf %153, %155 : vector<8x8xf32>
    %c0_101 = arith.constant 0 : index
    %c6_102 = arith.constant 6 : index
    %c0_103 = arith.constant 0 : index
    %c0_104 = arith.constant 0 : index
    %157 = vector.load %arg6[%c0_101, %c6_102, %c0_103, %c0_104] : memref<1x8x8x8xf32, #tpu.memory_space<vmem>>, vector<1x1x8x8xf32>
    %158 = vector.shape_cast %157 : vector<1x1x8x8xf32> to vector<8x8xf32>
    %159 = vector.shape_cast %156 : vector<8x8xf32> to vector<1x1x8x8xf32>
    tpu.vector_store %arg6[%c0_101, %c6_102, %c0_103, %c0_104], %159 {strides = array<i32>} : memref<1x8x8x8xf32, #tpu.memory_space<vmem>>, vector<1x1x8x8xf32>,
    %c7 = arith.constant 7 : index
    %c0_105 = arith.constant 0 : index
    %160 = memref.load %arg4[%c7, %c0_105] : memref<8x4xf32, #tpu.memory_space<smem>>
    %161 = vector.broadcast %160 : f32 to vector<8x8xf32>
    %162 = arith.mulf %3, %161 : vector<8x8xf32>
    %c7_106 = arith.constant 7 : index
    %c1_107 = arith.constant 1 : index
    %163 = memref.load %arg4[%c7_106, %c1_107] : memref<8x4xf32, #tpu.memory_space<smem>>
    %164 = vector.broadcast %163 : f32 to vector<8x8xf32>
    %165 = arith.mulf %6, %164 : vector<8x8xf32>
    %166 = arith.addf %162, %165 : vector<8x8xf32>
    %c7_108 = arith.constant 7 : index
    %c2_109 = arith.constant 2 : index
    %167 = memref.load %arg4[%c7_108, %c2_109] : memref<8x4xf32, #tpu.memory_space<smem>>
    %168 = vector.broadcast %167 : f32 to vector<8x8xf32>
    %169 = arith.mulf %9, %168 : vector<8x8xf32>
    %170 = arith.addf %166, %169 : vector<8x8xf32>
    %c7_110 = arith.constant 7 : index
    %c3_111 = arith.constant 3 : index
    %171 = memref.load %arg4[%c7_110, %c3_111] : memref<8x4xf32, #tpu.memory_space<smem>>
    %172 = vector.broadcast %171 : f32 to vector<8x8xf32>
    %173 = arith.mulf %12, %172 : vector<8x8xf32>
    %174 = arith.addf %170, %173 : vector<8x8xf32>
    %c7_112 = arith.constant 7 : index
    %175 = memref.load %arg5[%c7_112] : memref<8xf32, #tpu.memory_space<smem>>
    %176 = vector.broadcast %175 : f32 to vector<8x8xf32>
    %177 = arith.addf %174, %176 : vector<8x8xf32>
    %c0_113 = arith.constant 0 : index
    %c7_114 = arith.constant 7 : index
    %c0_115 = arith.constant 0 : index
    %c0_116 = arith.constant 0 : index
    %178 = vector.load %arg6[%c0_113, %c7_114, %c0_115, %c0_116] : memref<1x8x8x8xf32, #tpu.memory_space<vmem>>, vector<1x1x8x8xf32>
    %179 = vector.shape_cast %178 : vector<1x1x8x8xf32> to vector<8x8xf32>
    %180 = vector.shape_cast %177 : vector<8x8xf32> to vector<1x1x8x8xf32>
    tpu.vector_store %arg6[%c0_113, %c7_114, %c0_115, %c0_116], %180 {strides = array<i32>} : memref<1x8x8x8xf32, #tpu.memory_space<vmem>>, vector<1x1x8x8xf32>,
    return
  }
  func.func @transform_0(%arg0: i32, %arg1: i32) -> (i32, i32, i32, i32) {
    %c0_i32 = arith.constant 0 : i32
    %c0_i32_0 = arith.constant 0 : i32
    %c0_i32_1 = arith.constant 0 : i32
    return %arg0, %c0_i32, %arg1, %c0_i32_0 : i32, i32, i32, i32
  }
  func.func @transform_1(%arg0: i32, %arg1: i32) -> (i32, i32) {
    %c0_i32 = arith.constant 0 : i32
    %c0_i32_0 = arith.constant 0 : i32
    %c0_i32_1 = arith.constant 0 : i32
    return %c0_i32, %c0_i32_0 : i32, i32
  }
  func.func @transform_2(%arg0: i32, %arg1: i32) -> (i32, i32) {
    %c0_i32 = arith.constant 0 : i32
    %c0_i32_0 = arith.constant 0 : i32
    %c0_i32_1 = arith.constant 0 : i32
    return %c0_i32, %c0_i32_0 : i32, i32
  }
  func.func @transform_3(%arg0: i32, %arg1: i32) -> i32 {
    %c0_i32 = arith.constant 0 : i32
    %c0_i32_0 = arith.constant 0 : i32
    return %c0_i32 : i32
  }
  func.func @transform_4(%arg0: i32, %arg1: i32) -> (i32, i32, i32, i32) {
    %c0_i32 = arith.constant 0 : i32
    %c0_i32_0 = arith.constant 0 : i32
    %c0_i32_1 = arith.constant 0 : i32
    return %arg0, %c0_i32, %arg1, %c0_i32_0 : i32, i32, i32, i32
  }
}

</mosaic_0001>

<llo_original>
// kernel: downsample2d_avg2.1
$region0: #{downsample2d_avg2.1}
  #allocation0 [shape = 'u32[]', space=smem, size = 0x4, offset = 0x4, fixed_abs, tag = 'smem constant byte address 0x4 - core index']
  #allocation1 [shape = 'u32[144,128]{1,0:T(1,128)}', space=vmem, size = 0x12000, scoped, tag = 'internal scratch']
  %s0 = inlined_call_operand.vmem [shape: f32[2,4,8,32], index: 0, kind: input, shape index: {}]
  %s1 = inlined_call_operand.vmem [shape: f32[32,8], index: 1, kind: input, shape index: {}]
  %s2 = inlined_call_operand.vmem [shape: f32[8,4], index: 2, kind: input, shape index: {}]
  %s3 = inlined_call_operand.vmem [shape: f32[8], index: 3, kind: input, shape index: {}]
  %s4 = inlined_call_operand.hbm [shape: f32[2,8,8,8], index: 4, kind: output, shape index: {}]
  %s5 = sld [smem:[#allocation0]]
  $region57: #{downsample2d_avg2.1} parent=0
    _
  %s7 = ssub.s32 1, %s5
  %s8 = scalar_select 0, %s7, %s5
  $region1: #{downsample2d_avg2.1} parent=0
    #allocation2 [shape = 'u8[4096]{0}', space=smem, size = 0x1000, scoped, tag = 'input window, operand 2, single buffered']
    #allocation3 [shape = 's32[2]{0}', space=sflag, size = 0x8, scoped, tag = 'scoped memory for downsample2d_avg2.1']
    #allocation4 [shape = 's32[2]{0}', space=sflag, size = 0x8, scoped, tag = 'scoped memory for downsample2d_avg2.1']
    #allocation5 [shape = 'u8[512]{0}', space=smem, size = 0x200, scoped, tag = 'input window, operand 3, single buffered']
    #allocation6 [shape = 's32[1]{0}', space=sflag, size = 0x4, scoped, tag = 'scoped memory for downsample2d_avg2.1']
    #allocation7 [shape = 'u8[65536]{0}', space=vmem, size = 0x10000, scoped, tag = 'output window, operand 0']
    %9 = vsyncpa [#allocation4], 0
    %10 = vsyncpa [#allocation6], 0
    %11 = vsyncpa [#allocation3], 0
    %s12 = scalar_lea.sflag [#allocation3], 1
    %13 = vsyncpa %s12, 0
    loop: start=0, step=1, limit=4
    $region2: #{downsample2d_avg2.1} parent=1 // loop_pre_header
      _
    $region3: #{downsample2d_avg2.1} parent=1 // loop_header
      %s15 = sphi 0, %s19
      %p16 = scmp.ge.s32.totalorder %s15, 4
      %s22 = sphi 0, %s34
      %s23 = sphi 0, %s30
      %s24 = sphi 0, %s22
      %s25 = sphi 0, %s23
      %s26 = sphi 0, %s24
      %s27 = sphi 0, %s25
      %s39 = sphi 0, %s41
      %s42 = sphi 0, %s39
      %s43 = sphi 0, %s42
      %s59 = sphi 0, %s43
      %s63 = sphi 0, %s63
      %s65 = sphi 0, %s63
      %s66 = sphi 0, %s65
      %s80 = sphi 0, %s66
      %s84 = sphi 0, %s84
      %s86 = sphi 0, %s84
      %s87 = sphi 0, %s86
      %s101 = sphi 0, %s87
      %s105 = sphi 0, %s105
      %s107 = sphi 0, %s105
      %s108 = sphi 0, %s107
      %s122 = sphi 0, %s108
      %s130 = sphi 0, %s132
      %s133 = sphi 0, %s130
      %s134 = sphi 0, %s133
      %s150 = sphi 0, %s134
    $region4: #{downsample2d_avg2.1} parent=1 // loop_header_branch
      %18 = sbr.rel (%p16) target = $region8
    $region5: #{downsample2d_avg2.1} parent=1 // loop_body
      %s20 = ssub.s32 %s15, 1
      %s21 = ssub.s32 %s15, 2
      %s28 = sadd.s32 1, %s23
      %p29 = scmp.ge.s32.totalorder %s28, 1
      %s30 = scalar_select %p29, 0, %s28
      %s31 = sadd.s32 1, %s22
      %s32 = scalar_select %p29, %s31, %s22
      %p33 = scmp.ge.s32.totalorder %s32, 2
      %s34 = scalar_select %p33, 0, %s32
      %s35 = ssub.s32 %s22, %s34
      %s36 = ssub.s32 %s23, %s30
      %s37 = sor.u32 %s35, %s36
      %p38 = scmp.eq.s32.totalorder %s37, 0
      %s40 = sadd.s32 %s39, 1
      %s41 = scalar_select %p38, %s39, %s40
      %p44 = pneg %p38
      %p45 = scmp.eq.s32.totalorder %s15, 1
      %p46 = por %p44, %p45
      %p47 = scmp.ne.s32.totalorder %s39, %s42
      %p48 = scmp.eq.s32.totalorder %s15, 0
      %p49 = por %p47, %p48
      %p50 = scmp.ne.s32.totalorder %s39, %s42
      %p51 = scmp.eq.s32.totalorder %s20, 1
      %p52 = por %p50, %p51
      %p53 = scmp.ne.s32.totalorder %s42, %s43
      %p54 = scmp.eq.s32.totalorder %s20, 0
      %p55 = por %p53, %p54
      %p56 = scmp.ne.s32.totalorder %s42, %s43
      %p57 = scmp.eq.s32.totalorder %s21, 1
      %p58 = por %p56, %p57
      %p60 = scmp.ne.s32.totalorder %s43, %s59
      %p61 = scmp.eq.s32.totalorder %s21, 0
      %p62 = por %p60, %p61
      %s64 = sadd.s32 %s63, 1
      %p67 = scmp.eq.s32.totalorder %s15, 1
      %p68 = scmp.ne.s32.totalorder %s63, %s65
      %p69 = scmp.eq.s32.totalorder %s15, 0
      %p70 = por %p68, %p69
      %p71 = scmp.ne.s32.totalorder %s63, %s65
      %p72 = scmp.eq.s32.totalorder %s20, 1
      %p73 = por %p71, %p72
      %p74 = scmp.ne.s32.totalorder %s65, %s66
      %p75 = scmp.eq.s32.totalorder %s20, 0
      %p76 = por %p74, %p75
      %p77 = scmp.ne.s32.totalorder %s65, %s66
      %p78 = scmp.eq.s32.totalorder %s21, 1
      %p79 = por %p77, %p78
      %p81 = scmp.ne.s32.totalorder %s66, %s80
      %p82 = scmp.eq.s32.totalorder %s21, 0
      %p83 = por %p81, %p82
      %s85 = sadd.s32 %s84, 1
      %p88 = scmp.eq.s32.totalorder %s15, 1
      %p89 = scmp.ne.s32.totalorder %s84, %s86
      %p90 = scmp.eq.s32.totalorder %s15, 0
      %p91 = por %p89, %p90
      %p92 = scmp.ne.s32.totalorder %s84, %s86
      %p93 = scmp.eq.s32.totalorder %s20, 1
      %p94 = por %p92, %p93
      %p95 = scmp.ne.s32.totalorder %s86, %s87
      %p96 = scmp.eq.s32.totalorder %s20, 0
      %p97 = por %p95, %p96
      %p98 = scmp.ne.s32.totalorder %s86, %s87
      %p99 = scmp.eq.s32.totalorder %s21, 1
      %p100 = por %p98, %p99
      %p102 = scmp.ne.s32.totalorder %s87, %s101
      %p103 = scmp.eq.s32.totalorder %s21, 0
      %p104 = por %p102, %p103
      %s106 = sadd.s32 %s105, 1
      %p109 = scmp.eq.s32.totalorder %s15, 1
      %p110 = scmp.ne.s32.totalorder %s105, %s107
      %p111 = scmp.eq.s32.totalorder %s15, 0
      %p112 = por %p110, %p111
      %p113 = scmp.ne.s32.totalorder %s105, %s107
      %p114 = scmp.eq.s32.totalorder %s20, 1
      %p115 = por %p113, %p114
      %p116 = scmp.ne.s32.totalorder %s107, %s108
      %p117 = scmp.eq.s32.totalorder %s20, 0
      %p118 = por %p116, %p117
      %p119 = scmp.ne.s32.totalorder %s107, %s108
      %p120 = scmp.eq.s32.totalorder %s21, 1
      %p121 = por %p119, %p120
      %p123 = scmp.ne.s32.totalorder %s108, %s122
      %p124 = scmp.eq.s32.totalorder %s21, 0
      %p125 = por %p123, %p124
      %s126 = ssub.s32 %s22, %s34
      %s127 = ssub.s32 %s23, %s30
      %s128 = sor.u32 %s126, %s127
      %p129 = scmp.eq.s32.totalorder %s128, 0
      %s131 = sadd.s32 %s130, 1
      %s132 = scalar_select %p129, %s130, %s131
      %p135 = pneg %p129
      %p136 = scmp.eq.s32.totalorder %s15, 1
      %p137 = por %p135, %p136
      %p138 = scmp.ne.s32.totalorder %s130, %s133
      %p139 = scmp.eq.s32.totalorder %s15, 0
      %p140 = por %p138, %p139
      %p141 = scmp.ne.s32.totalorder %s130, %s133
      %p142 = scmp.eq.s32.totalorder %s20, 1
      %p143 = por %p141, %p142
      %p144 = scmp.ne.s32.totalorder %s133, %s134
      %p145 = scmp.eq.s32.totalorder %s20, 0
      %p146 = por %p144, %p145
      %p147 = scmp.ne.s32.totalorder %s133, %s134
      %p148 = scmp.eq.s32.totalorder %s21, 1
      %p149 = por %p147, %p148
      %p151 = scmp.ne.s32.totalorder %s134, %s150
      %p152 = scmp.eq.s32.totalorder %s21, 0
      %p153 = por %p151, %p152
      %p154 = scmp.le.s32.totalorder 1, %s15
      %p155 = scmp.lt.s32.totalorder %s15, 3
      %p156 = pnand %p154, %p155
      %p157 = pneg %p156
      // Predicated region
      $region9: #{downsample2d_avg2.1} parent=5 // pred_check
        _
      $region10: #{downsample2d_avg2.1} parent=5 // pred_check_branch
        %159 = sbr.rel (%p156) target = $region12
      $region11: #{downsample2d_avg2.1} parent=5 // pred_region
        %s160 = ssub.s32 %s15, 1
        // Predicated region
        $region13: #{downsample2d_avg2.1} parent=11 // pred_check
          %p161 = pneg %p76
        $region14: #{downsample2d_avg2.1} parent=11 // pred_check_branch
          %163 = sbr.rel (%p161) target = $region16
        $region15: #{downsample2d_avg2.1} parent=11 // pred_region
          _
        $region16: #{downsample2d_avg2.1} parent=11 // pred_fallthru
          _
        // Predicated region
        $region17: #{downsample2d_avg2.1} parent=11 // pred_check
          %p164 = pneg %p97
        $region18: #{downsample2d_avg2.1} parent=11 // pred_check_branch
          %166 = sbr.rel (%p164) target = $region20
        $region19: #{downsample2d_avg2.1} parent=11 // pred_region
          %s168 = ssub.s32 128, 128
          %169 = vsyncadd [#allocation4], %s168
          %s171 = sshll.u32 %s2, 4
          %s172 = int_to_ptr.vmem [resolvable:$true] %s171
          %174 = dma.vmem_to_smem %s172, 128, [#allocation2], [#allocation4]
        $region20: #{downsample2d_avg2.1} parent=11 // pred_fallthru
          _
        // Predicated region
        $region21: #{downsample2d_avg2.1} parent=11 // pred_check
          %p175 = pneg %p118
        $region22: #{downsample2d_avg2.1} parent=11 // pred_check_branch
          %177 = sbr.rel (%p175) target = $region24
        $region23: #{downsample2d_avg2.1} parent=11 // pred_region
          %s179 = ssub.s32 16, 16
          %180 = vsyncadd [#allocation6], %s179
          %s182 = sshll.u32 %s3, 4
          %s183 = int_to_ptr.vmem [resolvable:$true] %s182
          %185 = dma.vmem_to_smem %s183, 16, [#allocation5], [#allocation6]
        $region24: #{downsample2d_avg2.1} parent=11 // pred_fallthru
          _
      $region12: #{downsample2d_avg2.1} parent=5 // pred_fallthru
        _
      %p186 = scmp.lt.s32.totalorder %s15, 2
      // Predicated region
      $region25: #{downsample2d_avg2.1} parent=5 // pred_check
        %p187 = pneg %p186
      $region26: #{downsample2d_avg2.1} parent=5 // pred_check_branch
        %189 = sbr.rel (%p187) target = $region28
      $region27: #{downsample2d_avg2.1} parent=5 // pred_region
        // Predicated region
        $region29: #{downsample2d_avg2.1} parent=27 // pred_check
          %p190 = pneg %p49
        $region30: #{downsample2d_avg2.1} parent=27 // pred_check_branch
          %192 = sbr.rel (%p190) target = $region32
        $region31: #{downsample2d_avg2.1} parent=27 // pred_region
          %p193 = scmp.lt.s32.totalorder %s22, 1
          %s194 = scalar_select %p193, %s22, 1
          %p195 = scmp.lt.s32.totalorder %s23, 0
          %s196 = scalar_select %p195, %s23, 0
          %s197 = smul.addr %s194, 4
          %s198 = sadd.s32 %s196, %s197
          %s199 = smul.addr %s198, 8
          %s200 = scalar_lea.vmem %s0, %s199
        $region32: #{downsample2d_avg2.1} parent=27 // pred_fallthru
          _
      $region28: #{downsample2d_avg2.1} parent=5 // pred_fallthru
        _
      %p201 = scmp.le.s32.totalorder 1, %s15
      %p202 = scmp.lt.s32.totalorder %s15, 3
      %p203 = pnand %p201, %p202
      %p204 = pneg %p203
      // Predicated region
      $region33: #{downsample2d_avg2.1} parent=5 // pred_check
        _
      $region34: #{downsample2d_avg2.1} parent=5 // pred_check_branch
        %206 = sbr.rel (%p203) target = $region36
      $region35: #{downsample2d_avg2.1} parent=5 // pred_region
        %s207 = ssub.s32 %s15, 1
        // Predicated region
        $region37: #{downsample2d_avg2.1} parent=35 // pred_check
          %p208 = pneg %p97
        $region38: #{downsample2d_avg2.1} parent=35 // pred_check_branch
          %210 = sbr.rel (%p208) target = $region40
        $region39: #{downsample2d_avg2.1} parent=35 // pred_region
          %211 = dma.done [#allocation4], 128
        $region40: #{downsample2d_avg2.1} parent=35 // pred_fallthru
          _
        // Predicated region
        $region41: #{downsample2d_avg2.1} parent=35 // pred_check
          %p212 = pneg %p118
        $region42: #{downsample2d_avg2.1} parent=35 // pred_check_branch
          %214 = sbr.rel (%p212) target = $region44
        $region43: #{downsample2d_avg2.1} parent=35 // pred_region
          %215 = dma.done [#allocation6], 16
        $region44: #{downsample2d_avg2.1} parent=35 // pred_fallthru
          _
        %216 = sfence
        %p217 = scmp.lt.s32.totalorder %s24, 1
        %s218 = scalar_select %p217, %s24, 1
        %p219 = scmp.lt.s32.totalorder %s25, 0
        %s220 = scalar_select %p219, %s25, 0
        %s221 = smul.addr %s218, 4
        %s222 = sadd.s32 %s220, %s221
        %s223 = smul.addr %s222, 8
        %s224 = scalar_lea.vmem %s0, %s223
        %p225 = pneg %p55
        %p226 = pneg %p52
        %p227 = pneg %p76
        %p228 = pneg %p73
        %p229 = pneg %p97
        %p230 = pneg %p94
        %p231 = pneg %p118
        %p232 = pneg %p115
        %p233 = pneg %p146
        %p234 = pneg %p143
        %s235 = sand.u32 %s133, 1
        %s236 = scalar_lea.sflag [#allocation3], %s235
        %s237 = sand.u32 %s133, 1
        %s238 = smul.addr %s237, 64
        %s239 = scalar_lea.vmem [#allocation7], %s238
        %p240 = scmp.lt.s32.totalorder %s24, 1
        %s241 = scalar_select %p240, %s24, 1
        %p242 = scmp.lt.s32.totalorder %s25, 0
        %s243 = scalar_select %p242, %s25, 0
        %s244 = smul.addr %s241, 4
        %s245 = sadd.s32 %s243, %s244
        %s246 = smul.addr %s245, 8
        %s247 = scalar_lea.vmem %s0, %s246
        %v248 = vld [vmem:[%s1] sm:$0xff]
        %v249 = vld [vmem:[%s1 + $0x8] sm:$0xff]
        %v250 = vld [vmem:[%s1 + $0x10] sm:$0xff]
        %v251 = vld [vmem:[%s1 + $0x18] sm:$0xff]
        %v252 = vld [vmem:[%s247] sm:$0xff]
        %vm253 = vcmask 261120
        %v255 = vsel %vm253, %v252, 0
        %257 = vmatprep.subr.mxu0 0.0
        %258 = vmatpush1.msra.mxu0 %v248
        %259 = vmatprep.subr.mxu0 0.0
        %260 = vmatpush1.msra.mxu0 %v249
        %261 = vmatprep.subr.mxu0 0.0
        %262 = vmatpush1.msra.mxu0 %v250
        %263 = vmatprep.subr.mxu0 0.0
        %264 = vmatpush1.msra.mxu0 %v251
        %265 = vmatprep.subr.mxu0 0.0
        %266 = vmatpush1.msra.mxu0 0.0
        %267 = vmatprep.subr.mxu0 0.0
        %268 = vmatpush1.msra.mxu0 0.0
        %269 = vmatprep.subr.mxu0 0.0
        %270 = vmatpush1.msra.mxu0 0.0
        %271 = vmatprep.subr.mxu0 0.0
        %272 = vmatpush1.msra.mxu0 0.0
        %273 = vmatprep.subr.mxu0 0.0
        %274 = vmatpush1.msra.mxu0 0.0
        %275 = vmatprep.subr.mxu0 0.0
        %276 = vmatpush1.msra.mxu0 0.0
        %277 = vmatprep.subr.mxu0 0.0
        %278 = vmatpush1.msra.mxu0 0.0
        %279 = vmatprep.subr.mxu0 0.0
        %280 = vmatpush1.msra.mxu0 0.0
        %281 = vmatprep.subr.mxu0 0.0
        %282 = vmatpush1.msra.mxu0 0.0
        %283 = vmatprep.subr.mxu0 0.0
        %284 = vmatpush1.msra.mxu0 0.0
        %285 = vmatprep.subr.mxu0 0.0
        %286 = vmatpush1.msra.mxu0 0.0
        %287 = vmatprep.subr.mxu0 0.0
        %288 = vmatpush1.msra.mxu0 0.0
        %289 = vmatprep.subr.mxu0 0.0
        %290 = vmatpush1.msra.mxu0 0.0
        %291 = vmatprep.subr.mxu0 0.0
        %292 = vmatpush1.msra.mxu0 0.0
        %293 = vmatprep.subr.mxu0 0.0
        %294 = vmatpush1.msra.mxu0 0.0
        %295 = vmatprep.subr.mxu0 0.0
        %296 = vmatpush1.msra.mxu0 0.0
        %297 = vmatprep.subr.mxu0 0.0
        %298 = vmatpush1.msra.mxu0 0.0
        %299 = vmatprep.subr.mxu0 0.0
        %300 = vmatpush1.msra.mxu0 0.0
        %301 = vmatprep.subr.mxu0 0.0
        %302 = vmatpush1.msra.mxu0 0.0
        %303 = vmatprep.subr.mxu0 0.0
        %304 = vmatpush1.msra.mxu0 0.0
        %305 = vmatprep.subr.mxu0 0.0
        %306 = vmatpush1.msra.mxu0 0.0
        %307 = vmatprep.subr.mxu0 0.0
        %308 = vmatpush1.msra.mxu0 0.0
        %309 = vmatprep.subr.mxu0 0.0
        %310 = vmatpush1.msra.mxu0 0.0
        %311 = vmatprep.subr.mxu0 0.0
        %312 = vmatpush1.msra.mxu0 0.0
        %313 = vmatprep.subr.mxu0 0.0
        %314 = vmatpush1.msra.mxu0 0.0
        %315 = vmatprep.subr.mxu0 0.0
        %316 = vmatpush1.msra.mxu0 0.0
        %317 = vmatprep.subr.mxu0 0.0
        %318 = vmatpush1.msra.mxu0 0.0
        %319 = vmatprep.subr.mxu0 0.0
        %320 = vmatpush1.msra.mxu0 0.0
        %321 = vmatprep.mubr.f32.mxu0 0.0
        %322 = vmatmul.mubr.f32.gmra.mrb[0].mxu0 %v255
        %v323 = vpop.f32.mrb[0].mxu0
        %v324 = vadd.f32 0.0, %v323
        %v325 = vpop.f32.mrb[0].mxu0
        %326 = vdwg.mxu0
        %s327 = scalar_lea.vmem %s247, 8
        %v328 = vld [vmem:[%s327] sm:$0xff]
        %v330 = vsel %vm253, %v328, 0
        %332 = vmatprep.subr.mxu0 0.0
        %333 = vmatpush1.msra.mxu0 %v248
        %334 = vmatprep.subr.mxu0 0.0
        %335 = vmatpush1.msra.mxu0 %v249
        %336 = vmatprep.subr.mxu0 0.0
        %337 = vmatpush1.msra.mxu0 %v250
        %338 = vmatprep.subr.mxu0 0.0
        %339 = vmatpush1.msra.mxu0 %v251
        %340 = vmatprep.subr.mxu0 0.0
        %341 = vmatpush1.msra.mxu0 0.0
        %342 = vmatprep.subr.mxu0 0.0
        %343 = vmatpush1.msra.mxu0 0.0
        %344 = vmatprep.subr.mxu0 0.0
        %345 = vmatpush1.msra.mxu0 0.0
        %346 = vmatprep.subr.mxu0 0.0
        %347 = vmatpush1.msra.mxu0 0.0
        %348 = vmatprep.subr.mxu0 0.0
        %349 = vmatpush1.msra.mxu0 0.0
        %350 = vmatprep.subr.mxu0 0.0
        %351 = vmatpush1.msra.mxu0 0.0
        %352 = vmatprep.subr.mxu0 0.0
        %353 = vmatpush1.msra.mxu0 0.0
        %354 = vmatprep.subr.mxu0 0.0
        %355 = vmatpush1.msra.mxu0 0.0
        %356 = vmatprep.subr.mxu0 0.0
        %357 = vmatpush1.msra.mxu0 0.0
        %358 = vmatprep.subr.mxu0 0.0
        %359 = vmatpush1.msra.mxu0 0.0
        %360 = vmatprep.subr.mxu0 0.0
        %361 = vmatpush1.msra.mxu0 0.0
        %362 = vmatprep.subr.mxu0 0.0
        %363 = vmatpush1.msra.mxu0 0.0
        %364 = vmatprep.subr.mxu0 0.0
        %365 = vmatpush1.msra.mxu0 0.0
        %366 = vmatprep.subr.mxu0 0.0
        %367 = vmatpush1.msra.mxu0 0.0
        %368 = vmatprep.subr.mxu0 0.0
        %369 = vmatpush1.msra.mxu0 0.0
        %370 = vmatprep.subr.mxu0 0.0
        %371 = vmatpush1.msra.mxu0 0.0
        %372 = vmatprep.subr.mxu0 0.0
        %373 = vmatpush1.msra.mxu0 0.0
        %374 = vmatprep.subr.mxu0 0.0
        %375 = vmatpush1.msra.mxu0 0.0
        %376 = vmatprep.subr.mxu0 0.0
        %377 = vmatpush1.msra.mxu0 0.0
        %378 = vmatprep.subr.mxu0 0.0
        %379 = vmatpush1.msra.mxu0 0.0
        %380 = vmatprep.subr.mxu0 0.0
        %381 = vmatpush1.msra.mxu0 0.0
        %382 = vmatprep.subr.mxu0 0.0
        %383 = vmatpush1.msra.mxu0 0.0
        %384 = vmatprep.subr.mxu0 0.0
        %385 = vmatpush1.msra.mxu0 0.0
        %386 = vmatprep.subr.mxu0 0.0
        %387 = vmatpush1.msra.mxu0 0.0
        %388 = vmatprep.subr.mxu0 0.0
        %389 = vmatpush1.msra.mxu0 0.0
        %390 = vmatprep.subr.mxu0 0.0
        %391 = vmatpush1.msra.mxu0 0.0
        %392 = vmatprep.subr.mxu0 0.0
        %393 = vmatpush1.msra.mxu0 0.0
        %394 = vmatprep.subr.mxu0 0.0
        %395 = vmatpush1.msra.mxu0 0.0
        %396 = vmatprep.mubr.f32.mxu0 0.0
        %397 = vmatmul.mubr.f32.gmra.mrb[0].mxu0 %v330
        %v398 = vpop.f32.mrb[0].mxu0
        %v399 = vadd.f32 0.0, %v398
        %v400 = vpop.f32.mrb[0].mxu0
        %401 = vdwg.mxu0
        %s402 = scalar_lea.vmem %s247, 16
        %v403 = vld [vmem:[%s402] sm:$0xff]
        %v405 = vsel %vm253, %v403, 0
        %407 = vmatprep.subr.mxu0 0.0
        %408 = vmatpush1.msra.mxu0 %v248
        %409 = vmatprep.subr.mxu0 0.0
        %410 = vmatpush1.msra.mxu0 %v249
        %411 = vmatprep.subr.mxu0 0.0
        %412 = vmatpush1.msra.mxu0 %v250
        %413 = vmatprep.subr.mxu0 0.0
        %414 = vmatpush1.msra.mxu0 %v251
        %415 = vmatprep.subr.mxu0 0.0
        %416 = vmatpush1.msra.mxu0 0.0
        %417 = vmatprep.subr.mxu0 0.0
        %418 = vmatpush1.msra.mxu0 0.0
        %419 = vmatprep.subr.mxu0 0.0
        %420 = vmatpush1.msra.mxu0 0.0
        %421 = vmatprep.subr.mxu0 0.0
        %422 = vmatpush1.msra.mxu0 0.0
        %423 = vmatprep.subr.mxu0 0.0
        %424 = vmatpush1.msra.mxu0 0.0
        %425 = vmatprep.subr.mxu0 0.0
        %426 = vmatpush1.msra.mxu0 0.0
        %427 = vmatprep.subr.mxu0 0.0
        %428 = vmatpush1.msra.mxu0 0.0
        %429 = vmatprep.subr.mxu0 0.0
        %430 = vmatpush1.msra.mxu0 0.0
        %431 = vmatprep.subr.mxu0 0.0
        %432 = vmatpush1.msra.mxu0 0.0
        %433 = vmatprep.subr.mxu0 0.0
        %434 = vmatpush1.msra.mxu0 0.0
        %435 = vmatprep.subr.mxu0 0.0
        %436 = vmatpush1.msra.mxu0 0.0
        %437 = vmatprep.subr.mxu0 0.0
        %438 = vmatpush1.msra.mxu0 0.0
        %439 = vmatprep.subr.mxu0 0.0
        %440 = vmatpush1.msra.mxu0 0.0
        %441 = vmatprep.subr.mxu0 0.0
        %442 = vmatpush1.msra.mxu0 0.0
        %443 = vmatprep.subr.mxu0 0.0
        %444 = vmatpush1.msra.mxu0 0.0
        %445 = vmatprep.subr.mxu0 0.0
        %446 = vmatpush1.msra.mxu0 0.0
        %447 = vmatprep.subr.mxu0 0.0
        %448 = vmatpush1.msra.mxu0 0.0
        %449 = vmatprep.subr.mxu0 0.0
        %450 = vmatpush1.msra.mxu0 0.0
        %451 = vmatprep.subr.mxu0 0.0
        %452 = vmatpush1.msra.mxu0 0.0
        %453 = vmatprep.subr.mxu0 0.0
        %454 = vmatpush1.msra.mxu0 0.0
        %455 = vmatprep.subr.mxu0 0.0
        %456 = vmatpush1.msra.mxu0 0.0
        %457 = vmatprep.subr.mxu0 0.0
        %458 = vmatpush1.msra.mxu0 0.0
        %459 = vmatprep.subr.mxu0 0.0
        %460 = vmatpush1.msra.mxu0 0.0
        %461 = vmatprep.subr.mxu0 0.0
        %462 = vmatpush1.msra.mxu0 0.0
        %463 = vmatprep.subr.mxu0 0.0
        %464 = vmatpush1.msra.mxu0 0.0
        %465 = vmatprep.subr.mxu0 0.0
        %466 = vmatpush1.msra.mxu0 0.0
        %467 = vmatprep.subr.mxu0 0.0
        %468 = vmatpush1.msra.mxu0 0.0
        %469 = vmatprep.subr.mxu0 0.0
        %470 = vmatpush1.msra.mxu0 0.0
        %471 = vmatprep.mubr.f32.mxu0 0.0
        %472 = vmatmul.mubr.f32.gmra.mrb[0].mxu0 %v405
        %v473 = vpop.f32.mrb[0].mxu0
        %v474 = vadd.f32 0.0, %v473
        %v475 = vpop.f32.mrb[0].mxu0
        %476 = vdwg.mxu0
        %s477 = scalar_lea.vmem %s247, 24
        %v478 = vld [vmem:[%s477] sm:$0xff]
        %v480 = vsel %vm253, %v478, 0
        %482 = vmatprep.subr.mxu0 0.0
        %483 = vmatpush1.msra.mxu0 %v248
        %484 = vmatprep.subr.mxu0 0.0
        %485 = vmatpush1.msra.mxu0 %v249
        %486 = vmatprep.subr.mxu0 0.0
        %487 = vmatpush1.msra.mxu0 %v250
        %488 = vmatprep.subr.mxu0 0.0
        %489 = vmatpush1.msra.mxu0 %v251
        %490 = vmatprep.subr.mxu0 0.0
        %491 = vmatpush1.msra.mxu0 0.0
        %492 = vmatprep.subr.mxu0 0.0
        %493 = vmatpush1.msra.mxu0 0.0
        %494 = vmatprep.subr.mxu0 0.0
        %495 = vmatpush1.msra.mxu0 0.0
        %496 = vmatprep.subr.mxu0 0.0
        %497 = vmatpush1.msra.mxu0 0.0
        %498 = vmatprep.subr.mxu0 0.0
        %499 = vmatpush1.msra.mxu0 0.0
        %500 = vmatprep.subr.mxu0 0.0
        %501 = vmatpush1.msra.mxu0 0.0
        %502 = vmatprep.subr.mxu0 0.0
        %503 = vmatpush1.msra.mxu0 0.0
        %504 = vmatprep.subr.mxu0 0.0
        %505 = vmatpush1.msra.mxu0 0.0
        %506 = vmatprep.subr.mxu0 0.0
        %507 = vmatpush1.msra.mxu0 0.0
        %508 = vmatprep.subr.mxu0 0.0
        %509 = vmatpush1.msra.mxu0 0.0
        %510 = vmatprep.subr.mxu0 0.0
        %511 = vmatpush1.msra.mxu0 0.0
        %512 = vmatprep.subr.mxu0 0.0
        %513 = vmatpush1.msra.mxu0 0.0
        %514 = vmatprep.subr.mxu0 0.0
        %515 = vmatpush1.msra.mxu0 0.0
        %516 = vmatprep.subr.mxu0 0.0
        %517 = vmatpush1.msra.mxu0 0.0
        %518 = vmatprep.subr.mxu0 0.0
        %519 = vmatpush1.msra.mxu0 0.0
        %520 = vmatprep.subr.mxu0 0.0
        %521 = vmatpush1.msra.mxu0 0.0
        %522 = vmatprep.subr.mxu0 0.0
        %523 = vmatpush1.msra.mxu0 0.0
        %524 = vmatprep.subr.mxu0 0.0
        %525 = vmatpush1.msra.mxu0 0.0
        %526 = vmatprep.subr.mxu0 0.0
        %527 = vmatpush1.msra.mxu0 0.0
        %528 = vmatprep.subr.mxu0 0.0
        %529 = vmatpush1.msra.mxu0 0.0
        %530 = vmatprep.subr.mxu0 0.0
        %531 = vmatpush1.msra.mxu0 0.0
        %532 = vmatprep.subr.mxu0 0.0
        %533 = vmatpush1.msra.mxu0 0.0
        %534 = vmatprep.subr.mxu0 0.0
        %535 = vmatpush1.msra.mxu0 0.0
        %536 = vmatprep.subr.mxu0 0.0
        %537 = vmatpush1.msra.mxu0 0.0
        %538 = vmatprep.subr.mxu0 0.0
        %539 = vmatpush1.msra.mxu0 0.0
        %540 = vmatprep.subr.mxu0 0.0
        %541 = vmatpush1.msra.mxu0 0.0
        %542 = vmatprep.subr.mxu0 0.0
        %543 = vmatpush1.msra.mxu0 0.0
        %544 = vmatprep.subr.mxu0 0.0
        %545 = vmatpush1.msra.mxu0 0.0
        %546 = vmatprep.mubr.f32.mxu0 0.0
        %547 = vmatmul.mubr.f32.gmra.mrb[0].mxu0 %v480
        %v548 = vpop.f32.mrb[0].mxu0
        %v549 = vadd.f32 0.0, %v548
        %v550 = vpop.f32.mrb[0].mxu0
        %551 = vdwg.mxu0
        %s552 = sld [smem:[#allocation2]]
        %v553 = vstv %s552
        %v554 = vmul.f32 %v324, %v553
        %s555 = sld [smem:[#allocation2 + $0x1]]
        %v556 = vstv %s555
        %v557 = vmul.f32 %v399, %v556
        %v558 = vadd.f32 %v554, %v557
        %s559 = sld [smem:[#allocation2 + $0x2]]
        %v560 = vstv %s559
        %v561 = vmul.f32 %v474, %v560
        %v562 = vadd.f32 %v558, %v561
        %s563 = sld [smem:[#allocation2 + $0x3]]
        %v564 = vstv %s563
        %v565 = vmul.f32 %v549, %v564
        %v566 = vadd.f32 %v562, %v565
        %s567 = sld [smem:[#allocation5]]
        %v568 = vstv %s567
        %v569 = vadd.f32 %v566, %v568
        %vm570 = vcmask 64512
        %571 = vst.msk [vmem:[%s239] sm:$0xff] %vm570, %v569
        %s572 = sld [smem:[#allocation2 + $0x80]]
        %v573 = vstv %s572
        %v574 = vmul.f32 %v324, %v573
        %s575 = sld [smem:[#allocation2 + $0x81]]
        %v576 = vstv %s575
        %v577 = vmul.f32 %v399, %v576
        %v578 = vadd.f32 %v574, %v577
        %s579 = sld [smem:[#allocation2 + $0x82]]
        %v580 = vstv %s579
        %v581 = vmul.f32 %v474, %v580
        %v582 = vadd.f32 %v578, %v581
        %s583 = sld [smem:[#allocation2 + $0x83]]
        %v584 = vstv %s583
        %v585 = vmul.f32 %v549, %v584
        %v586 = vadd.f32 %v582, %v585
        %s587 = sld [smem:[#allocation5 + $0x1]]
        %v588 = vstv %s587
        %v589 = vadd.f32 %v586, %v588
        %s590 = scalar_lea.vmem %s239, 8 [#allocation7]
        %591 = vst.msk [vmem:[%s590] sm:$0xff] %vm570, %v589
        %s592 = sld [smem:[#allocation2 + $0x100]]
        %v593 = vstv %s592
        %v594 = vmul.f32 %v324, %v593
        %s595 = sld [smem:[#allocation2 + $0x101]]
        %v596 = vstv %s595
        %v597 = vmul.f32 %v399, %v596
        %v598 = vadd.f32 %v594, %v597
        %s599 = sld [smem:[#allocation2 + $0x102]]
        %v600 = vstv %s599
        %v601 = vmul.f32 %v474, %v600
        %v602 = vadd.f32 %v598, %v601
        %s603 = sld [smem:[#allocation2 + $0x103]]
        %v604 = vstv %s603
        %v605 = vmul.f32 %v549, %v604
        %v606 = vadd.f32 %v602, %v605
        %s607 = sld [smem:[#allocation5 + $0x2]]
        %v608 = vstv %s607
        %v609 = vadd.f32 %v606, %v608
        %s610 = scalar_lea.vmem %s239, 16 [#allocation7]
        %611 = vst.msk [vmem:[%s610] sm:$0xff] %vm570, %v609
        %s612 = sld [smem:[#allocation2 + $0x180]]
        %v613 = vstv %s612
        %v614 = vmul.f32 %v324, %v613
        %s615 = sld [smem:[#allocation2 + $0x181]]
        %v616 = vstv %s615
        %v617 = vmul.f32 %v399, %v616
        %v618 = vadd.f32 %v614, %v617
        %s619 = sld [smem:[#allocation2 + $0x182]]
        %v620 = vstv %s619
        %v621 = vmul.f32 %v474, %v620
        %v622 = vadd.f32 %v618, %v621
        %s623 = sld [smem:[#allocation2 + $0x183]]
        %v624 = vstv %s623
        %v625 = vmul.f32 %v549, %v624
        %v626 = vadd.f32 %v622, %v625
        %s627 = sld [smem:[#allocation5 + $0x3]]
        %v628 = vstv %s627
        %v629 = vadd.f32 %v626, %v628
        %s630 = scalar_lea.vmem %s239, 24 [#allocation7]
        %631 = vst.msk [vmem:[%s630] sm:$0xff] %vm570, %v629
        %s632 = sld [smem:[#allocation2 + $0x200]]
        %v633 = vstv %s632
        %v634 = vmul.f32 %v324, %v633
        %s635 = sld [smem:[#allocation2 + $0x201]]
        %v636 = vstv %s635
        %v637 = vmul.f32 %v399, %v636
        %v638 = vadd.f32 %v634, %v637
        %s639 = sld [smem:[#allocation2 + $0x202]]
        %v640 = vstv %s639
        %v641 = vmul.f32 %v474, %v640
        %v642 = vadd.f32 %v638, %v641
        %s643 = sld [smem:[#allocation2 + $0x203]]
        %v644 = vstv %s643
        %v645 = vmul.f32 %v549, %v644
        %v646 = vadd.f32 %v642, %v645
        %s647 = sld [smem:[#allocation5 + $0x4]]
        %v648 = vstv %s647
        %v649 = vadd.f32 %v646, %v648
        %s650 = scalar_lea.vmem %s239, 32 [#allocation7]
        %651 = vst.msk [vmem:[%s650] sm:$0xff] %vm570, %v649
        %s652 = sld [smem:[#allocation2 + $0x280]]
        %v653 = vstv %s652
        %v654 = vmul.f32 %v324, %v653
        %s655 = sld [smem:[#allocation2 + $0x281]]
        %v656 = vstv %s655
        %v657 = vmul.f32 %v399, %v656
        %v658 = vadd.f32 %v654, %v657
        %s659 = sld [smem:[#allocation2 + $0x282]]
        %v660 = vstv %s659
        %v661 = vmul.f32 %v474, %v660
        %v662 = vadd.f32 %v658, %v661
        %s663 = sld [smem:[#allocation2 + $0x283]]
        %v664 = vstv %s663
        %v665 = vmul.f32 %v549, %v664
        %v666 = vadd.f32 %v662, %v665
        %s667 = sld [smem:[#allocation5 + $0x5]]
        %v668 = vstv %s667
        %v669 = vadd.f32 %v666, %v668
        %s670 = scalar_lea.vmem %s239, 40 [#allocation7]
        %671 = vst.msk [vmem:[%s670] sm:$0xff] %vm570, %v669
        %s672 = sld [smem:[#allocation2 + $0x300]]
        %v673 = vstv %s672
        %v674 = vmul.f32 %v324, %v673
        %s675 = sld [smem:[#allocation2 + $0x301]]
        %v676 = vstv %s675
        %v677 = vmul.f32 %v399, %v676
        %v678 = vadd.f32 %v674, %v677
        %s679 = sld [smem:[#allocation2 + $0x302]]
        %v680 = vstv %s679
        %v681 = vmul.f32 %v474, %v680
        %v682 = vadd.f32 %v678, %v681
        %s683 = sld [smem:[#allocation2 + $0x303]]
        %v684 = vstv %s683
        %v685 = vmul.f32 %v549, %v684
        %v686 = vadd.f32 %v682, %v685
        %s687 = sld [smem:[#allocation5 + $0x6]]
        %v688 = vstv %s687
        %v689 = vadd.f32 %v686, %v688
        %s690 = scalar_lea.vmem %s239, 48 [#allocation7]
        %691 = vst.msk [vmem:[%s690] sm:$0xff] %vm570, %v689
        %s692 = sld [smem:[#allocation2 + $0x380]]
        %v693 = vstv %s692
        %v694 = vmul.f32 %v324, %v693
        %s695 = sld [smem:[#allocation2 + $0x381]]
        %v696 = vstv %s695
        %v697 = vmul.f32 %v399, %v696
        %v698 = vadd.f32 %v694, %v697
        %s699 = sld [smem:[#allocation2 + $0x382]]
        %v700 = vstv %s699
        %v701 = vmul.f32 %v474, %v700
        %v702 = vadd.f32 %v698, %v701
        %s703 = sld [smem:[#allocation2 + $0x383]]
        %v704 = vstv %s703
        %v705 = vmul.f32 %v549, %v704
        %v706 = vadd.f32 %v702, %v705
        %s707 = sld [smem:[#allocation5 + $0x7]]
        %v708 = vstv %s707
        %v709 = vadd.f32 %v706, %v708
        %s710 = scalar_lea.vmem %s239, 56 [#allocation7]
        %711 = vst.msk [vmem:[%s710] sm:$0xff] %vm570, %v709
        %s712 = sand.u32 %s133, 1
        %s713 = scalar_lea.sflag [#allocation3], %s712
        %s714 = sand.u32 %s133, 1
        %s715 = smul.addr %s714, 64
        %s716 = scalar_lea.vmem [#allocation7], %s715
        // Predicated region
        $region45: #{downsample2d_avg2.1} parent=35 // pred_check
          %p717 = pneg %p143
        $region46: #{downsample2d_avg2.1} parent=35 // pred_check_branch
          %719 = sbr.rel (%p717) target = $region48
        $region47: #{downsample2d_avg2.1} parent=35 // pred_region
          %s721 = ssub.s32 1024, 1024
          %722 = vsyncadd %s713, %s721
          %s723 = smul.addr %s24, 8
          %s724 = sadd.s32 %s25, %s723
          %s725 = smul.addr %s724, 128
          %s726 = scalar_lea.hbm %s4, %s725
          %s727 = sshll.u32 %s716, 4
          %s728 = int_to_ptr.vmem [resolvable:$true] %s727
          %733 = dma.vmem_to_hbm [thread:$0]  %s728, 1024, %s726, %s713, 128, 128, 8
        $region48: #{downsample2d_avg2.1} parent=35 // pred_fallthru
          _
      $region36: #{downsample2d_avg2.1} parent=5 // pred_fallthru
        _
      %p734 = scmp.le.s32.totalorder 2, %s15
      // Predicated region
      $region49: #{downsample2d_avg2.1} parent=5 // pred_check
        %p735 = pneg %p734
      $region50: #{downsample2d_avg2.1} parent=5 // pred_check_branch
        %737 = sbr.rel (%p735) target = $region52
      $region51: #{downsample2d_avg2.1} parent=5 // pred_region
        %s738 = ssub.s32 %s15, 2
        // Predicated region
        $region53: #{downsample2d_avg2.1} parent=51 // pred_check
          %p739 = pneg %p149
        $region54: #{downsample2d_avg2.1} parent=51 // pred_check_branch
          %741 = sbr.rel (%p739) target = $region56
        $region55: #{downsample2d_avg2.1} parent=51 // pred_region
          %s742 = sand.u32 %s134, 1
          %s743 = scalar_lea.sflag [#allocation3], %s742
          %s744 = sand.u32 %s134, 1
          %s745 = smul.addr %s744, 64
          %s746 = scalar_lea.vmem [#allocation7], %s745
          %747 = dma.done %s743, 1024
        $region56: #{downsample2d_avg2.1} parent=51 // pred_fallthru
          _
      $region52: #{downsample2d_avg2.1} parent=5 // pred_fallthru
        _
    $region6: #{downsample2d_avg2.1} parent=1 // loop_footer
      %s19 = sadd.s32 1, %s15
    $region7: #{downsample2d_avg2.1} parent=1 // loop_footer_branch
      %14 = sbr.rel target = $region3
    $region8: #{downsample2d_avg2.1} parent=1 // loop_exit
      _
    %748 = vsyncpa [#allocation3], 1
    %s749 = scalar_lea.sflag [#allocation3], 1
    %750 = vsyncpa %s749, 1
    %751 = vsyncpa [#allocation4], 1
    %s752 = scalar_lea.sflag [#allocation4], 1
    %753 = vsyncpa %s752, 1
    %754 = vsyncpa [#allocation6], 1

</llo_original>
